<compile_context>
chip_gen: v6e
topology: v6e:2x2x1
jax: 0.10.0
libtpu: 0.0.40
codegen_flags: <defaults>
</compile_context>

<pallas_src>
import jax
import jax.numpy as jnp
from jax.experimental import pallas as pl
from jax.experimental.pallas import tpu as pltpu

EPS = 1e-5          # python float -> compile-time literal (no captured constant)
H1, H2 = 256, 128   # hidden sizes fixed by the module


def _bn_train(h, gamma, beta):
    """BatchNorm1d (training mode) folded to a single per-feature scale/shift."""
    mu = jnp.mean(h, axis=0, keepdims=True)
    ex2 = jnp.mean(h * h, axis=0, keepdims=True)
    var = jnp.maximum(ex2 - mu * mu, 0.0)   # clamp: E[h^2]-mu^2 may dip below 0
    scale = gamma * jax.lax.rsqrt(var + EPS)
    shift = beta - mu * scale
    return h * scale + shift


def encoder_kernel(x_ref, w1_ref, w2_ref, w3_ref, bn_ref, o_ref):
    # Packed BN params (f32): row0/1 = gamma1/beta1 (256 lanes),
    # row2/3 = gamma2/beta2 (128 lanes), row4/5 = gamma3/beta3 (out_size lanes).
    bn = bn_ref[...]
    out_n = o_ref.shape[-1]

    # ---- fc1 (bf16 MXU operands, f32 accumulation) + BN + ReLU ----
    # Linear biases are omitted: a pre-BN per-feature bias cancels exactly
    # under the training-mode batch-mean subtraction.
    x = x_ref[...].astype(jnp.bfloat16)
    h1 = jnp.dot(x, w1_ref[...], preferred_element_type=jnp.float32)
    h1 = jnp.maximum(_bn_train(h1, bn[0:1, :H1], bn[1:2, :H1]), 0.0)

    # ---- fc2 + BN + ReLU ----
    h2 = jnp.dot(h1.astype(jnp.bfloat16), w2_ref[...],
                 preferred_element_type=jnp.float32)
    h2 = jnp.maximum(_bn_train(h2, bn[2:3, :H2], bn[3:4, :H2]), 0.0)

    # ---- fc3 + BN ----
    z = jnp.dot(h2.astype(jnp.bfloat16), w3_ref[...],
                preferred_element_type=jnp.float32)
    z = _bn_train(z, bn[4:5, :out_n], bn[5:6, :out_n])

    # ---- softmax over features (dim=1); EUP approximate reciprocal ----
    m = jnp.max(z, axis=-1, keepdims=True)
    e = jnp.exp(z - m)
    denom = jnp.sum(e, axis=-1, keepdims=True)
    o_ref[...] = (e * pl.reciprocal(denom, approx=True)).astype(o_ref.dtype)


def prepare_params(params):
    """One-time parameter prep (hoisted out of the per-call path):
    cast weights to bf16 and pack the six BN vectors into one (8, 256) array."""
    out_size = params["w3"].shape[1]
    bn = jnp.zeros((8, H1), jnp.float32)
    bn = bn.at[0, :H1].set(params["g1"][0])
    bn = bn.at[1, :H1].set(params["be1"][0])
    bn = bn.at[2, :H2].set(params["g2"][0])
    bn = bn.at[3, :H2].set(params["be2"][0])
    bn = bn.at[4, :out_size].set(params["g3"][0])
    bn = bn.at[5, :out_size].set(params["be3"][0])
    return {
        "w1": params["w1"].astype(jnp.bfloat16),   # (in, 256)  -- K left unpadded
        "w2": params["w2"].astype(jnp.bfloat16),   # (256, 128)
        "w3": params["w3"].astype(jnp.bfloat16),   # (128, out) -- N left unpadded
        "bn": bn,                                  # (8, 256) f32, one DMA
    }


@jax.jit
def encoder_forward(x, prep):
    """x: (B, input_size) float32.  prep: output of prepare_params()."""
    B = x.shape[0]
    out_size = prep["w3"].shape[1]
    vmem = pl.BlockSpec(memory_space=pltpu.MemorySpace.VMEM)
    return pl.pallas_call(
        encoder_kernel,
        out_shape=jax.ShapeDtypeStruct((B, out_size), jnp.float32),
        in_specs=[vmem] * 5,
        out_specs=vmem,
        compiler_params=pltpu.CompilerParams(vmem_limit_bytes=32 << 20),
    )(x, prep["w1"], prep["w2"], prep["w3"], prep["bn"])


def init_params(key, input_size, output_size):
    """Mirror PyTorch defaults:
    Linear: W, b ~ U(-1/sqrt(fan_in), 1/sqrt(fan_in)); BatchNorm1d: gamma=1, beta=0.
    Weights stored transposed as (in, out); vectors as (1, out).
    Biases are kept for reference fidelity but cancel under train-mode BN, so
    the kernel never consumes them."""
    dims = [(input_size, 256), (256, 128), (128, output_size)]
    params = {}
    for i, (fan_in, fan_out) in enumerate(dims, start=1):
        key, kw, kb = jax.random.split(key, 3)
        bound = 1.0 / jnp.sqrt(float(fan_in))
        params[f"w{i}"] = jax.random.uniform(
            kw, (fan_in, fan_out), jnp.float32, -bound, bound)
        params[f"b{i}"] = jax.random.uniform(
            kb, (1, fan_out), jnp.float32, -bound, bound)
        params[f"g{i}"] = jnp.ones((1, fan_out), jnp.float32)
        params[f"be{i}"] = jnp.zeros((1, fan_out), jnp.float32)
    return params


def encoder_reference(x, p):
    """Pure-JAX f32 reference matching the PyTorch module (training-mode BN),
    including the Linear biases (which cancel under BN)."""
    def bn(h, g, b):
        mu = jnp.mean(h, axis=0, keepdims=True)
        var = jnp.mean((h - mu) ** 2, axis=0, keepdims=True)
        return (h - mu) / jnp.sqrt(var + EPS) * g + b

    h = jax.nn.relu(bn(x @ p["w1"] + p["b1"], p["g1"], p["be1"]))
    h = jax.nn.relu(bn(h @ p["w2"] + p["b2"], p["g2"], p["be2"]))
    z = bn(h @ p["w3"] + p["b3"], p["g3"], p["be3"])
    return jax.nn.softmax(z, axis=1)


if __name__ == "__main__":
    key = jax.random.PRNGKey(0)
    batch, input_size, output_size = 8, 32, 16

    key, kx, kp = jax.random.split(key, 3)
    x = jax.random.normal(kx, (batch, input_size), jnp.float32)
    params = init_params(kp, input_size, output_size)

    prep = prepare_params(params)          # one-time; not on the per-call path
    out = encoder_forward(x, prep)
    out = jax.block_until_ready(out)

    # sanity: shape, softmax rows sum to ~1 (approx reciprocal => loose tol)
    assert out.shape == (batch, output_size)
    assert jnp.allclose(jnp.sum(out, axis=-1), 1.0, atol=5e-3)

    # tolerance check vs. f32 reference (bf16 MXU operands => ~1e-2 slack)
    ref = encoder_reference(x, params)
    assert jnp.allclose(out, ref, atol=5e-2), float(jnp.max(jnp.abs(out - ref)))

    print("KERNEL_OK")
</pallas_src>

<mosaic_0001>
module attributes {stable_mosaic.version = 11 : i64} {
  func.func @encoder_kernel(%arg0: memref<8x32xf32, #tpu.memory_space<vmem>>, %arg1: memref<32x256xbf16, #tpu.memory_space<vmem>>, %arg2: memref<256x128xbf16, #tpu.memory_space<vmem>>, %arg3: memref<128x16xbf16, #tpu.memory_space<vmem>>, %arg4: memref<8x256xf32, #tpu.memory_space<vmem>>, %arg5: memref<8x16xf32, #tpu.memory_space<vmem>>) attributes {dimension_semantics = [], scalar_prefetch = 0 : i64, scratch_operands = 0 : i64, tpu.core_type = #tpu.core_type<tc>} {
    %c0 = arith.constant 0 : index
    %c0_0 = arith.constant 0 : index
    %0 = vector.load %arg4[%c0, %c0_0] : memref<8x256xf32, #tpu.memory_space<vmem>>, vector<8x256xf32>
    %c0_1 = arith.constant 0 : index
    %c0_2 = arith.constant 0 : index
    %1 = vector.load %arg0[%c0_1, %c0_2] : memref<8x32xf32, #tpu.memory_space<vmem>>, vector<8x32xf32>
    %2 = arith.truncf %1 : vector<8x32xf32> to vector<8x32xbf16>
    %c0_3 = arith.constant 0 : index
    %c0_4 = arith.constant 0 : index
    %3 = vector.load %arg1[%c0_3, %c0_4] : memref<32x256xbf16, #tpu.memory_space<vmem>>, vector<32x256xbf16>
    %cst = arith.constant dense<0.000000e+00> : vector<8x256xf32>
    %4 = tpu.matmul %2, %3, %cst {dimension_numbers = #tpu.dot_dimension_numbers<[1], [0], [0], [1], [0, 0, 1, 1], [], []>} : vector<8x32xbf16>, vector<32x256xbf16>, vector<8x256xf32> -> vector<8x256xf32>
    %5 = vector.extract_strided_slice %0 {offsets = [0, 0], sizes = [1, 256], strides = [1, 1]} : vector<8x256xf32> to vector<1x256xf32>
    %6 = vector.extract_strided_slice %0 {offsets = [1, 0], sizes = [1, 256], strides = [1, 1]} : vector<8x256xf32> to vector<1x256xf32>
    %cst_5 = arith.constant dense<0.000000e+00> : vector<256xf32>
    %7 = vector.multi_reduction <add>, %4, %cst_5 [0] : vector<8x256xf32> to vector<256xf32>
    %8 = vector.shape_cast %7 : vector<256xf32> to vector<1x256xf32>
    %cst_6 = arith.constant 8.000000e+00 : f32
    %9 = vector.broadcast %cst_6 : f32 to vector<1x256xf32>
    %10 = arith.divf %8, %9 : vector<1x256xf32>
    %11 = arith.mulf %4, %4 : vector<8x256xf32>
    %cst_7 = arith.constant dense<0.000000e+00> : vector<256xf32>
    %12 = vector.multi_reduction <add>, %11, %cst_7 [0] : vector<8x256xf32> to vector<256xf32>
    %13 = vector.shape_cast %12 : vector<256xf32> to vector<1x256xf32>
    %cst_8 = arith.constant 8.000000e+00 : f32
    %14 = vector.broadcast %cst_8 : f32 to vector<1x256xf32>
    %15 = arith.divf %13, %14 : vector<1x256xf32>
    %16 = arith.mulf %10, %10 : vector<1x256xf32>
    %17 = arith.subf %15, %16 : vector<1x256xf32>
    %cst_9 = arith.constant 0.000000e+00 : f32
    %18 = vector.broadcast %cst_9 : f32 to vector<1x256xf32>
    %19 = arith.maximumf %17, %18 : vector<1x256xf32>
    %cst_10 = arith.constant 9.99999974E-6 : f32
    %20 = vector.broadcast %cst_10 : f32 to vector<1x256xf32>
    %21 = arith.addf %19, %20 : vector<1x256xf32>
    %22 = math.rsqrt %21 : vector<1x256xf32>
    %23 = arith.mulf %5, %22 : vector<1x256xf32>
    %24 = arith.mulf %10, %23 : vector<1x256xf32>
    %25 = arith.subf %6, %24 : vector<1x256xf32>
    %26 = vector.broadcast %23 : vector<1x256xf32> to vector<8x256xf32>
    %27 = arith.mulf %4, %26 : vector<8x256xf32>
    %28 = vector.broadcast %25 : vector<1x256xf32> to vector<8x256xf32>
    %29 = arith.addf %27, %28 : vector<8x256xf32>
    %cst_11 = arith.constant 0.000000e+00 : f32
    %30 = vector.broadcast %cst_11 : f32 to vector<8x256xf32>
    %31 = arith.maximumf %29, %30 : vector<8x256xf32>
    %32 = arith.truncf %31 : vector<8x256xf32> to vector<8x256xbf16>
    %c0_12 = arith.constant 0 : index
    %c0_13 = arith.constant 0 : index
    %33 = vector.load %arg2[%c0_12, %c0_13] : memref<256x128xbf16, #tpu.memory_space<vmem>>, vector<256x128xbf16>
    %cst_14 = arith.constant dense<0.000000e+00> : vector<8x128xf32>
    %34 = tpu.matmul %32, %33, %cst_14 {dimension_numbers = #tpu.dot_dimension_numbers<[1], [0], [0], [1], [0, 0, 1, 1], [], []>} : vector<8x256xbf16>, vector<256x128xbf16>, vector<8x128xf32> -> vector<8x128xf32>
    %35 = vector.extract_strided_slice %0 {offsets = [2, 0], sizes = [1, 128], strides = [1, 1]} : vector<8x256xf32> to vector<1x128xf32>
    %36 = vector.extract_strided_slice %0 {offsets = [3, 0], sizes = [1, 128], strides = [1, 1]} : vector<8x256xf32> to vector<1x128xf32>
    %cst_15 = arith.constant dense<0.000000e+00> : vector<128xf32>
    %37 = vector.multi_reduction <add>, %34, %cst_15 [0] : vector<8x128xf32> to vector<128xf32>
    %38 = vector.shape_cast %37 : vector<128xf32> to vector<1x128xf32>
    %cst_16 = arith.constant 8.000000e+00 : f32
    %39 = vector.broadcast %cst_16 : f32 to vector<1x128xf32>
    %40 = arith.divf %38, %39 : vector<1x128xf32>
    %41 = arith.mulf %34, %34 : vector<8x128xf32>
    %cst_17 = arith.constant dense<0.000000e+00> : vector<128xf32>
    %42 = vector.multi_reduction <add>, %41, %cst_17 [0] : vector<8x128xf32> to vector<128xf32>
    %43 = vector.shape_cast %42 : vector<128xf32> to vector<1x128xf32>
    %cst_18 = arith.constant 8.000000e+00 : f32
    %44 = vector.broadcast %cst_18 : f32 to vector<1x128xf32>
    %45 = arith.divf %43, %44 : vector<1x128xf32>
    %46 = arith.mulf %40, %40 : vector<1x128xf32>
    %47 = arith.subf %45, %46 : vector<1x128xf32>
    %cst_19 = arith.constant 0.000000e+00 : f32
    %48 = vector.broadcast %cst_19 : f32 to vector<1x128xf32>
    %49 = arith.maximumf %47, %48 : vector<1x128xf32>
    %cst_20 = arith.constant 9.99999974E-6 : f32
    %50 = vector.broadcast %cst_20 : f32 to vector<1x128xf32>
    %51 = arith.addf %49, %50 : vector<1x128xf32>
    %52 = math.rsqrt %51 : vector<1x128xf32>
    %53 = arith.mulf %35, %52 : vector<1x128xf32>
    %54 = arith.mulf %40, %53 : vector<1x128xf32>
    %55 = arith.subf %36, %54 : vector<1x128xf32>
    %56 = vector.broadcast %53 : vector<1x128xf32> to vector<8x128xf32>
    %57 = arith.mulf %34, %56 : vector<8x128xf32>
    %58 = vector.broadcast %55 : vector<1x128xf32> to vector<8x128xf32>
    %59 = arith.addf %57, %58 : vector<8x128xf32>
    %cst_21 = arith.constant 0.000000e+00 : f32
    %60 = vector.broadcast %cst_21 : f32 to vector<8x128xf32>
    %61 = arith.maximumf %59, %60 : vector<8x128xf32>
    %62 = arith.truncf %61 : vector<8x128xf32> to vector<8x128xbf16>
    %c0_22 = arith.constant 0 : index
    %c0_23 = arith.constant 0 : index
    %63 = vector.load %arg3[%c0_22, %c0_23] : memref<128x16xbf16, #tpu.memory_space<vmem>>, vector<128x16xbf16>
    %cst_24 = arith.constant dense<0.000000e+00> : vector<8x16xf32>
    %64 = tpu.matmul %62, %63, %cst_24 {dimension_numbers = #tpu.dot_dimension_numbers<[1], [0], [0], [1], [0, 0, 1, 1], [], []>} : vector<8x128xbf16>, vector<128x16xbf16>, vector<8x16xf32> -> vector<8x16xf32>
    %65 = vector.extract_strided_slice %0 {offsets = [4, 0], sizes = [1, 16], strides = [1, 1]} : vector<8x256xf32> to vector<1x16xf32>
    %66 = vector.extract_strided_slice %0 {offsets = [5, 0], sizes = [1, 16], strides = [1, 1]} : vector<8x256xf32> to vector<1x16xf32>
    %cst_25 = arith.constant dense<0.000000e+00> : vector<16xf32>
    %67 = vector.multi_reduction <add>, %64, %cst_25 [0] : vector<8x16xf32> to vector<16xf32>
    %68 = vector.shape_cast %67 : vector<16xf32> to vector<1x16xf32>
    %cst_26 = arith.constant 8.000000e+00 : f32
    %69 = vector.broadcast %cst_26 : f32 to vector<1x16xf32>
    %70 = arith.divf %68, %69 : vector<1x16xf32>
    %71 = arith.mulf %64, %64 : vector<8x16xf32>
    %cst_27 = arith.constant dense<0.000000e+00> : vector<16xf32>
    %72 = vector.multi_reduction <add>, %71, %cst_27 [0] : vector<8x16xf32> to vector<16xf32>
    %73 = vector.shape_cast %72 : vector<16xf32> to vector<1x16xf32>
    %cst_28 = arith.constant 8.000000e+00 : f32
    %74 = vector.broadcast %cst_28 : f32 to vector<1x16xf32>
    %75 = arith.divf %73, %74 : vector<1x16xf32>
    %76 = arith.mulf %70, %70 : vector<1x16xf32>
    %77 = arith.subf %75, %76 : vector<1x16xf32>
    %cst_29 = arith.constant 0.000000e+00 : f32
    %78 = vector.broadcast %cst_29 : f32 to vector<1x16xf32>
    %79 = arith.maximumf %77, %78 : vector<1x16xf32>
    %cst_30 = arith.constant 9.99999974E-6 : f32
    %80 = vector.broadcast %cst_30 : f32 to vector<1x16xf32>
    %81 = arith.addf %79, %80 : vector<1x16xf32>
    %82 = math.rsqrt %81 : vector<1x16xf32>
    %83 = arith.mulf %65, %82 : vector<1x16xf32>
    %84 = arith.mulf %70, %83 : vector<1x16xf32>
    %85 = arith.subf %66, %84 : vector<1x16xf32>
    %86 = vector.broadcast %83 : vector<1x16xf32> to vector<8x16xf32>
    %87 = arith.mulf %64, %86 : vector<8x16xf32>
    %88 = vector.broadcast %85 : vector<1x16xf32> to vector<8x16xf32>
    %89 = arith.addf %87, %88 : vector<8x16xf32>
    %cst_31 = arith.constant dense<0xFF800000> : vector<8xf32>
    %90 = vector.multi_reduction <maximumf>, %89, %cst_31 [1] : vector<8x16xf32> to vector<8xf32>
    %91 = vector.shape_cast %90 : vector<8xf32> to vector<8x1xf32>
    %92 = vector.broadcast %91 : vector<8x1xf32> to vector<8x16xf32>
    %93 = arith.subf %89, %92 : vector<8x16xf32>
    %94 = math.exp %93 : vector<8x16xf32>
    %cst_32 = arith.constant dense<0.000000e+00> : vector<8xf32>
    %95 = vector.multi_reduction <add>, %94, %cst_32 [1] : vector<8x16xf32> to vector<8xf32>
    %96 = vector.shape_cast %95 : vector<8xf32> to vector<8x1xf32>
    %97 = tpu.reciprocal %96 {approx = true} : vector<8x1xf32> -> vector<8x1xf32>
    %98 = vector.broadcast %97 : vector<8x1xf32> to vector<8x16xf32>
    %99 = arith.mulf %94, %98 : vector<8x16xf32>
    %c0_33 = arith.constant 0 : index
    %c0_34 = arith.constant 0 : index
    %100 = vector.load %arg5[%c0_33, %c0_34] : memref<8x16xf32, #tpu.memory_space<vmem>>, vector<8x16xf32>
    tpu.vector_store %arg5[%c0_33, %c0_34], %99 {strides = array<i32>} : memref<8x16xf32, #tpu.memory_space<vmem>>, vector<8x16xf32>,
    return
  }
}

</mosaic_0001>

<llo_original>
// kernel: encoder_forward.1
$region0: #{encoder_forward.1}
  #allocation0 [shape = 'u32[]', space=smem, size = 0x4, offset = 0x4, fixed_abs, tag = 'smem constant byte address 0x4 - core index']
  #allocation1 [shape = 'u32[144,128]{1,0:T(1,128)}', space=vmem, size = 0x12000, scoped, tag = 'internal scratch']
  %s0 = inlined_call_operand.vmem [shape: f32[8,32], index: 0, kind: input, shape index: {}]
  %s1 = inlined_call_operand.vmem [shape: bf16[32,256], index: 1, kind: input, shape index: {}]
  %s2 = inlined_call_operand.hbm [shape: bf16[256,128], index: 2, kind: input, shape index: {}]
  %s3 = inlined_call_operand.vmem [shape: bf16[128,16], index: 3, kind: input, shape index: {}]
  %s4 = inlined_call_operand.vmem [shape: f32[8,256], index: 4, kind: input, shape index: {}]
  %s5 = inlined_call_operand.hbm [shape: f32[8,16], index: 5, kind: output, shape index: {}]
  %s6 = sld [smem:[#allocation0]]
  $region34: #{encoder_forward.1} parent=0
    _
  %s8 = ssub.s32 1, %s6
  %s9 = scalar_select 0, %s8, %s6
  $region1: #{encoder_forward.1} parent=0
    #allocation2 [shape = 'u8[65536]{0}', space=vmem, size = 0x10000, scoped, tag = 'input window, operand 2, single buffered']
    #allocation3 [shape = 's32[1]{0}', space=sflag, size = 0x4, scoped, tag = 'scoped memory for encoder_forward.1']
    #allocation4 [shape = 's32[1]{0}', space=sflag, size = 0x4, scoped, tag = 'scoped memory for encoder_forward.1']
    #allocation5 [shape = 'u8[4096]{0}', space=vmem, size = 0x1000, scoped, tag = 'output window, operand 0, single buffered']
    %10 = vsyncpa [#allocation3], 0
    %11 = vsyncpa [#allocation4], 0
    // Predicated region
    $region2: #{encoder_forward.1} parent=1 // pred_check
      _
    $region3: #{encoder_forward.1} parent=1 // pred_check_branch
      %13 = sbr.rel (0) target = $region5
    $region4: #{encoder_forward.1} parent=1 // pred_region
      _
    $region5: #{encoder_forward.1} parent=1 // pred_fallthru
      _
    // Predicated region
    $region6: #{encoder_forward.1} parent=1 // pred_check
      _
    $region7: #{encoder_forward.1} parent=1 // pred_check_branch
      %15 = sbr.rel (0) target = $region9
    $region8: #{encoder_forward.1} parent=1 // pred_region
      _
    $region9: #{encoder_forward.1} parent=1 // pred_fallthru
      _
    // Predicated region
    $region10: #{encoder_forward.1} parent=1 // pred_check
      _
    $region11: #{encoder_forward.1} parent=1 // pred_check_branch
      %17 = sbr.rel (0) target = $region13
    $region12: #{encoder_forward.1} parent=1 // pred_region
      %s19 = ssub.s32 2048, 2048
      %20 = vsyncadd [#allocation3], %s19
      %s21 = sshll.u32 [#allocation2], 4
      %s22 = int_to_ptr.vmem [resolvable:$true] %s21
      %27 = dma.hbm_to_vmem [thread:$0]  %s2, 2048, %s22, [#allocation3], 64, 64, 4
    $region13: #{encoder_forward.1} parent=1 // pred_fallthru
      _
    // Predicated region
    $region14: #{encoder_forward.1} parent=1 // pred_check
      _
    $region15: #{encoder_forward.1} parent=1 // pred_check_branch
      %29 = sbr.rel (0) target = $region17
    $region16: #{encoder_forward.1} parent=1 // pred_region
      _
    $region17: #{encoder_forward.1} parent=1 // pred_fallthru
      _
    // Predicated region
    $region18: #{encoder_forward.1} parent=1 // pred_check
      _
    $region19: #{encoder_forward.1} parent=1 // pred_check_branch
      %31 = sbr.rel (0) target = $region21
    $region20: #{encoder_forward.1} parent=1 // pred_region
      _
    $region21: #{encoder_forward.1} parent=1 // pred_fallthru
      _
    // Predicated region
    $region22: #{encoder_forward.1} parent=1 // pred_check
      _
    $region23: #{encoder_forward.1} parent=1 // pred_check_branch
      %33 = sbr.rel (0) target = $region25
    $region24: #{encoder_forward.1} parent=1 // pred_region
      %34 = dma.done [#allocation3], 2048
    $region25: #{encoder_forward.1} parent=1 // pred_fallthru
      _
    %v36 = vld [vmem:[%s4] sm:$0xff]
    %v37 = vld [vmem:[%s4 + $0x8] sm:$0xff]
    %v38 = vld [vmem:[%s0] sm:$0xff]
    %v39 = vpack.c.bf16 %v38, %v38
    %v40 = vld [vmem:[%s1] sm:$0xff]
    %v41 = vld [vmem:[%s1 + $0x8] sm:$0xff]
    %v42 = vld [vmem:[%s1 + $0x10] sm:$0xff]
    %v43 = vld [vmem:[%s1 + $0x18] sm:$0xff]
    %v48 = vunpack.c.l.b16 %v40
    %v49 = vunpack.c.h.b16 %v40
    %v50 = vunpack.c.l.b16 %v41
    %v51 = vunpack.c.h.b16 %v41
    %v52 = vunpack.c.l.b16 %v42
    %v53 = vunpack.c.h.b16 %v42
    %v54 = vunpack.c.l.b16 %v43
    %v55 = vunpack.c.h.b16 %v43
    %v56 = vpack.c.b16 %v50, %v48
    %v57 = vpack.c.b16 %v51, %v49
    %v58 = vpack.c.b16 %v54, %v52
    %v59 = vpack.c.b16 %v55, %v53
    %vm64 = vcmask 261120
    %v66 = vsel %vm64, %v39, 0
    %68 = vmatprep.subr.bf16.mxu0 0
    %69 = vmatpush1.bf16.msra.mxu0 0
    %70 = vmatprep.subr.bf16.mxu0 0
    %71 = vmatpush1.bf16.msra.mxu0 0
    %72 = vmatprep.subr.bf16.mxu0 0
    %73 = vmatpush1.bf16.msra.mxu0 0
    %74 = vmatprep.subr.bf16.mxu0 0
    %75 = vmatpush1.bf16.msra.mxu0 0
    %76 = vmatprep.subr.bf16.mxu0 0
    %77 = vmatpush1.bf16.msra.mxu0 0
    %78 = vmatprep.subr.bf16.mxu0 0
    %79 = vmatpush1.bf16.msra.mxu0 0
    %80 = vmatprep.subr.bf16.mxu0 %v59
    %81 = vmatpush1.bf16.msra.mxu0 %v58
    %82 = vmatprep.subr.bf16.mxu0 %v57
    %83 = vmatpush1.bf16.msra.mxu0 %v56
    %84 = vmatprep.subr.bf16.mxu0 0
    %85 = vmatpush2.bf16.msra.mxu0 0
    %86 = vmatprep.subr.bf16.mxu0 0
    %87 = vmatpush2.bf16.msra.mxu0 0
    %88 = vmatprep.subr.bf16.mxu0 0
    %89 = vmatpush2.bf16.msra.mxu0 0
    %90 = vmatprep.subr.bf16.mxu0 0
    %91 = vmatpush2.bf16.msra.mxu0 0
    %92 = vmatprep.subr.bf16.mxu0 0
    %93 = vmatpush2.bf16.msra.mxu0 0
    %94 = vmatprep.subr.bf16.mxu0 0
    %95 = vmatpush2.bf16.msra.mxu0 0
    %96 = vmatprep.subr.bf16.mxu0 0
    %97 = vmatpush2.bf16.msra.mxu0 0
    %98 = vmatprep.subr.bf16.mxu0 0
    %99 = vmatpush2.bf16.msra.mxu0 0
    %100 = vmatprep.mubr.bf16.mxu0 0
    %101 = vmatmul.mubr.bf16.gmra.mxu0 %v66
    %v102 = vpop.f32.mrf.mxu0
    %v103 = vadd.f32 0.0, %v102
    %v104 = vpop.f32.mrf.mxu0
    %v105 = vadd.f32 0.0, %v104
    %v106 = vpop.f32.mrf.mxu0
    %v107 = vpop.f32.mrf.mxu0
    %108 = vdwg.mxu0
    %v109 = vrot.slane %v103, 4
    %v110 = vadd.f32 %v103, %v109
    %v111 = vrot.slane %v110, 2
    %v112 = vadd.f32 %v110, %v111
    %v113 = vrot.slane %v112, 1
    %v114 = vadd.f32 %v112, %v113
    %v115 = vrot.slane %v105, 4
    %v116 = vadd.f32 %v105, %v115
    %v117 = vrot.slane %v116, 2
    %v118 = vadd.f32 %v116, %v117
    %v119 = vrot.slane %v118, 1
    %v120 = vadd.f32 %v118, %v119
    %v121 = vrcp.pop 8.0
    %v122 = vmul.f32 %v114, %v121
    %v123 = vmul.f32 %v120, %v121
    %v124 = vmul.f32 %v103, %v103
    %v125 = vmul.f32 %v105, %v105
    %v126 = vrot.slane %v124, 4
    %v127 = vadd.f32 %v124, %v126
    %v128 = vrot.slane %v127, 2
    %v129 = vadd.f32 %v127, %v128
    %v130 = vrot.slane %v129, 1
    %v131 = vadd.f32 %v129, %v130
    %v132 = vrot.slane %v125, 4
    %v133 = vadd.f32 %v125, %v132
    %v134 = vrot.slane %v133, 2
    %v135 = vadd.f32 %v133, %v134
    %v136 = vrot.slane %v135, 1
    %v137 = vadd.f32 %v135, %v136
    %v138 = vmul.f32 %v131, %v121
    %v139 = vmul.f32 %v137, %v121
    %v140 = vmul.f32 %v122, %v122
    %v141 = vmul.f32 %v123, %v123
    %v142 = vsub.f32 %v138, %v140
    %v143 = vsub.f32 %v139, %v141
    %v144 = vmax.f32 %v142, 0.0
    %v145 = vmax.f32 %v143, 0.0
    %v146 = vadd.f32 %v144, 1e-05
    %v147 = vadd.f32 %v145, 1e-05
    %v148 = vrsqrt.pop %v146
    %v149 = vrsqrt.pop %v147
    %v150 = vmul.f32 %v36, %v148
    %v151 = vmul.f32 %v37, %v149
    %v152 = vmul.f32 %v122, %v150
    %v153 = vmul.f32 %v123, %v151
    %v156 = vrot.slane %v152, 7
    %v157 = vrot.slane %v153, 7
    %v160 = vsub.f32 %v36, %v156
    %v161 = vsub.f32 %v37, %v157
    %v162 = vlaneseq
    %v163 = vshrl.u32 %v162, 7
    %v164 = vsub.s32 0, %v163
    %v165 = vrot.slane %v150, %v164
    %v166 = vlaneseq
    %v167 = vshrl.u32 %v166, 7
    %v168 = vsub.s32 0, %v167
    %v169 = vrot.slane %v151, %v168
    %v170 = vmul.f32 %v103, %v165
    %v171 = vmul.f32 %v105, %v169
    %v172 = vlaneseq
    %v173 = vshrl.u32 %v172, 7
    %v174 = vsub.s32 1, %v173
    %v175 = vrot.slane %v160, %v174
    %v176 = vlaneseq
    %v177 = vshrl.u32 %v176, 7
    %v178 = vsub.s32 1, %v177
    %v179 = vrot.slane %v161, %v178
    %v180 = vadd.f32 %v170, %v175
    %v181 = vadd.f32 %v171, %v179
    %v182 = vmax.f32 %v180, 0.0
    %v183 = vmax.f32 %v181, 0.0
    %v184 = vpack.c.bf16 %v182, %v182
    %v185 = vpack.c.bf16 %v183, %v183
    %v186 = vld [vmem:[#allocation2] sm:$0xf]
    %v187 = vld [vmem:[#allocation2 + $0x4] sm:$0xf]
    %v188 = vld [vmem:[#allocation2 + $0x8] sm:$0xf]
    %v189 = vld [vmem:[#allocation2 + $0xc] sm:$0xf]
    %v190 = vld [vmem:[#allocation2 + $0x10] sm:$0xf]
    %v191 = vld [vmem:[#allocation2 + $0x14] sm:$0xf]
    %v192 = vld [vmem:[#allocation2 + $0x18] sm:$0xf]
    %v193 = vld [vmem:[#allocation2 + $0x1c] sm:$0xf]
    %v194 = vld [vmem:[#allocation2 + $0x20] sm:$0xf]
    %v195 = vld [vmem:[#allocation2 + $0x24] sm:$0xf]
    %v196 = vld [vmem:[#allocation2 + $0x28] sm:$0xf]
    %v197 = vld [vmem:[#allocation2 + $0x2c] sm:$0xf]
    %v198 = vld [vmem:[#allocation2 + $0x30] sm:$0xf]
    %v199 = vld [vmem:[#allocation2 + $0x34] sm:$0xf]
    %v200 = vld [vmem:[#allocation2 + $0x38] sm:$0xf]
    %v201 = vld [vmem:[#allocation2 + $0x3c] sm:$0xf]
    %v202 = vld [vmem:[#allocation2 + $0x40] sm:$0xf]
    %v203 = vld [vmem:[#allocation2 + $0x44] sm:$0xf]
    %v204 = vld [vmem:[#allocation2 + $0x48] sm:$0xf]
    %v205 = vld [vmem:[#allocation2 + $0x4c] sm:$0xf]
    %v206 = vld [vmem:[#allocation2 + $0x50] sm:$0xf]
    %v207 = vld [vmem:[#allocation2 + $0x54] sm:$0xf]
    %v208 = vld [vmem:[#allocation2 + $0x58] sm:$0xf]
    %v209 = vld [vmem:[#allocation2 + $0x5c] sm:$0xf]
    %v210 = vld [vmem:[#allocation2 + $0x60] sm:$0xf]
    %v211 = vld [vmem:[#allocation2 + $0x64] sm:$0xf]
    %v212 = vld [vmem:[#allocation2 + $0x68] sm:$0xf]
    %v213 = vld [vmem:[#allocation2 + $0x6c] sm:$0xf]
    %v214 = vld [vmem:[#allocation2 + $0x70] sm:$0xf]
    %v215 = vld [vmem:[#allocation2 + $0x74] sm:$0xf]
    %v216 = vld [vmem:[#allocation2 + $0x78] sm:$0xf]
    %v217 = vld [vmem:[#allocation2 + $0x7c] sm:$0xf]
    %v250 = vunpack.c.l.b16 %v186
    %v251 = vunpack.c.l.b16 %v187
    %v252 = vunpack.c.l.b16 %v188
    %v253 = vunpack.c.l.b16 %v189
    %v254 = vunpack.c.l.b16 %v190
    %v255 = vunpack.c.l.b16 %v191
    %v256 = vunpack.c.l.b16 %v192
    %v257 = vunpack.c.l.b16 %v193
    %v258 = vunpack.c.l.b16 %v194
    %v259 = vunpack.c.l.b16 %v195
    %v260 = vunpack.c.l.b16 %v196
    %v261 = vunpack.c.l.b16 %v197
    %v262 = vunpack.c.l.b16 %v198
    %v263 = vunpack.c.l.b16 %v199
    %v264 = vunpack.c.l.b16 %v200
    %v265 = vunpack.c.l.b16 %v201
    %v266 = vunpack.c.l.b16 %v202
    %v267 = vunpack.c.l.b16 %v203
    %v268 = vunpack.c.l.b16 %v204
    %v269 = vunpack.c.l.b16 %v205
    %v270 = vunpack.c.l.b16 %v206
    %v271 = vunpack.c.l.b16 %v207
    %v272 = vunpack.c.l.b16 %v208
    %v273 = vunpack.c.l.b16 %v209
    %v274 = vunpack.c.l.b16 %v210
    %v275 = vunpack.c.l.b16 %v211
    %v276 = vunpack.c.l.b16 %v212
    %v277 = vunpack.c.l.b16 %v213
    %v278 = vunpack.c.l.b16 %v214
    %v279 = vunpack.c.l.b16 %v215
    %v280 = vunpack.c.l.b16 %v216
    %v281 = vunpack.c.l.b16 %v217
    %v282 = vpack.c.b16 %v251, %v250
    %v283 = vpack.c.b16 %v253, %v252
    %v284 = vpack.c.b16 %v255, %v254
    %v285 = vpack.c.b16 %v257, %v256
    %v286 = vpack.c.b16 %v259, %v258
    %v287 = vpack.c.b16 %v261, %v260
    %v288 = vpack.c.b16 %v263, %v262
    %v289 = vpack.c.b16 %v265, %v264
    %v290 = vpack.c.b16 %v267, %v266
    %v291 = vpack.c.b16 %v269, %v268
    %v292 = vpack.c.b16 %v271, %v270
    %v293 = vpack.c.b16 %v273, %v272
    %v294 = vpack.c.b16 %v275, %v274
    %v295 = vpack.c.b16 %v277, %v276
    %v296 = vpack.c.b16 %v279, %v278
    %v297 = vpack.c.b16 %v281, %v280
    %314 = vmatprep.subr.bf16.mxu0 0
    %315 = vmatpush1.bf16.msra.mxu0 %v289
    %316 = vmatprep.subr.bf16.mxu0 0
    %317 = vmatpush1.bf16.msra.mxu0 %v288
    %318 = vmatprep.subr.bf16.mxu0 0
    %319 = vmatpush1.bf16.msra.mxu0 %v287
    %320 = vmatprep.subr.bf16.mxu0 0
    %321 = vmatpush1.bf16.msra.mxu0 %v286
    %322 = vmatprep.subr.bf16.mxu0 0
    %323 = vmatpush1.bf16.msra.mxu0 %v285
    %324 = vmatprep.subr.bf16.mxu0 0
    %325 = vmatpush1.bf16.msra.mxu0 %v284
    %326 = vmatprep.subr.bf16.mxu0 0
    %327 = vmatpush1.bf16.msra.mxu0 %v283
    %328 = vmatprep.subr.bf16.mxu0 0
    %329 = vmatpush1.bf16.msra.mxu0 %v282
    %330 = vmatprep.subr.bf16.mxu0 0
    %331 = vmatpush2.bf16.msra.mxu0 %v297
    %332 = vmatprep.subr.bf16.mxu0 0
    %333 = vmatpush2.bf16.msra.mxu0 %v296
    %334 = vmatprep.subr.bf16.mxu0 0
    %335 = vmatpush2.bf16.msra.mxu0 %v295
    %336 = vmatprep.subr.bf16.mxu0 0
    %337 = vmatpush2.bf16.msra.mxu0 %v294
    %338 = vmatprep.subr.bf16.mxu0 0
    %339 = vmatpush2.bf16.msra.mxu0 %v293
    %340 = vmatprep.subr.bf16.mxu0 0
    %341 = vmatpush2.bf16.msra.mxu0 %v292
    %342 = vmatprep.subr.bf16.mxu0 0
    %343 = vmatpush2.bf16.msra.mxu0 %v291
    %344 = vmatprep.subr.bf16.mxu0 0
    %345 = vmatpush2.bf16.msra.mxu0 %v290
    %346 = vmatprep.mubr.bf16.mxu0 %v185
    %347 = vmatmul.mubr.bf16.gmra.mxu0 %v184
    %v348 = vpop.f32.mrf.mxu0
    %v349 = vadd.f32 0.0, %v348
    %v350 = vpop.f32.mrf.mxu0
    %v351 = vpop.f32.mrf.mxu0
    %v352 = vpop.f32.mrf.mxu0
    %353 = vdwg.mxu0
    %v354 = vrot.slane %v349, 4
    %v355 = vadd.f32 %v349, %v354
    %v356 = vrot.slane %v355, 2
    %v357 = vadd.f32 %v355, %v356
    %v358 = vrot.slane %v357, 1
    %v359 = vadd.f32 %v357, %v358
    %v360 = vmul.f32 %v359, %v121
    %v361 = vmul.f32 %v349, %v349
    %v362 = vrot.slane %v361, 4
    %v363 = vadd.f32 %v361, %v362
    %v364 = vrot.slane %v363, 2
    %v365 = vadd.f32 %v363, %v364
    %v366 = vrot.slane %v365, 1
    %v367 = vadd.f32 %v365, %v366
    %v368 = vmul.f32 %v367, %v121
    %v369 = vmul.f32 %v360, %v360
    %v370 = vsub.f32 %v368, %v369
    %v371 = vmax.f32 %v370, 0.0
    %v372 = vadd.f32 %v371, 1e-05
    %v373 = vrsqrt.pop %v372
    %v374 = vmul.f32 %v36, %v373
    %v375 = vmul.f32 %v360, %v374
    %v377 = vrot.slane %v375, 7
    %v379 = vsub.f32 %v36, %v377
    %v380 = vlaneseq
    %v381 = vshrl.u32 %v380, 7
    %v382 = vsub.s32 2, %v381
    %v383 = vrot.slane %v374, %v382
    %v384 = vmul.f32 %v349, %v383
    %v385 = vlaneseq
    %v386 = vshrl.u32 %v385, 7
    %v387 = vsub.s32 3, %v386
    %v388 = vrot.slane %v379, %v387
    %v389 = vadd.f32 %v384, %v388
    %v390 = vmax.f32 %v389, 0.0
    %v391 = vpack.c.bf16 %v390, %v390
    %v392 = vld [vmem:[%s3] sm:$0xf]
    %v393 = vld [vmem:[%s3 + $0x4] sm:$0xf]
    %v394 = vld [vmem:[%s3 + $0x8] sm:$0xf]
    %v395 = vld [vmem:[%s3 + $0xc] sm:$0xf]
    %v396 = vld [vmem:[%s3 + $0x10] sm:$0xf]
    %v397 = vld [vmem:[%s3 + $0x14] sm:$0xf]
    %v398 = vld [vmem:[%s3 + $0x18] sm:$0xf]
    %v399 = vld [vmem:[%s3 + $0x1c] sm:$0xf]
    %v400 = vld [vmem:[%s3 + $0x20] sm:$0xf]
    %v401 = vld [vmem:[%s3 + $0x24] sm:$0xf]
    %v402 = vld [vmem:[%s3 + $0x28] sm:$0xf]
    %v403 = vld [vmem:[%s3 + $0x2c] sm:$0xf]
    %v404 = vld [vmem:[%s3 + $0x30] sm:$0xf]
    %v405 = vld [vmem:[%s3 + $0x34] sm:$0xf]
    %v406 = vld [vmem:[%s3 + $0x38] sm:$0xf]
    %v407 = vld [vmem:[%s3 + $0x3c] sm:$0xf]
    %v424 = vunpack.c.l.b16 %v392
    %v425 = vunpack.c.l.b16 %v393
    %v426 = vunpack.c.l.b16 %v394
    %v427 = vunpack.c.l.b16 %v395
    %v428 = vunpack.c.l.b16 %v396
    %v429 = vunpack.c.l.b16 %v397
    %v430 = vunpack.c.l.b16 %v398
    %v431 = vunpack.c.l.b16 %v399
    %v432 = vunpack.c.l.b16 %v400
    %v433 = vunpack.c.l.b16 %v401
    %v434 = vunpack.c.l.b16 %v402
    %v435 = vunpack.c.l.b16 %v403
    %v436 = vunpack.c.l.b16 %v404
    %v437 = vunpack.c.l.b16 %v405
    %v438 = vunpack.c.l.b16 %v406
    %v439 = vunpack.c.l.b16 %v407
    %v440 = vpack.c.b16 %v425, %v424
    %v441 = vpack.c.b16 %v427, %v426
    %v442 = vpack.c.b16 %v429, %v428
    %v443 = vpack.c.b16 %v431, %v430
    %v444 = vpack.c.b16 %v433, %v432
    %v445 = vpack.c.b16 %v435, %v434
    %v446 = vpack.c.b16 %v437, %v436
    %v447 = vpack.c.b16 %v439, %v438
    %456 = vmatprep.subr.bf16.mxu0 0
    %457 = vmatpush1.bf16.msra.mxu0 %v447
    %458 = vmatprep.subr.bf16.mxu0 0
    %459 = vmatpush1.bf16.msra.mxu0 %v446
    %460 = vmatprep.subr.bf16.mxu0 0
    %461 = vmatpush1.bf16.msra.mxu0 %v445
    %462 = vmatprep.subr.bf16.mxu0 0
    %463 = vmatpush1.bf16.msra.mxu0 %v444
    %464 = vmatprep.subr.bf16.mxu0 0
    %465 = vmatpush1.bf16.msra.mxu0 %v443
    %466 = vmatprep.subr.bf16.mxu0 0
    %467 = vmatpush1.bf16.msra.mxu0 %v442
    %468 = vmatprep.subr.bf16.mxu0 0
    %469 = vmatpush1.bf16.msra.mxu0 %v441
    %470 = vmatprep.subr.bf16.mxu0 0
    %471 = vmatpush1.bf16.msra.mxu0 %v440
    %472 = vmatprep.subr.bf16.mxu0 0
    %473 = vmatpush2.bf16.msra.mxu0 0
    %474 = vmatprep.subr.bf16.mxu0 0
    %475 = vmatpush2.bf16.msra.mxu0 0
    %476 = vmatprep.subr.bf16.mxu0 0
    %477 = vmatpush2.bf16.msra.mxu0 0
    %478 = vmatprep.subr.bf16.mxu0 0
    %479 = vmatpush2.bf16.msra.mxu0 0
    %480 = vmatprep.subr.bf16.mxu0 0
    %481 = vmatpush2.bf16.msra.mxu0 0
    %482 = vmatprep.subr.bf16.mxu0 0
    %483 = vmatpush2.bf16.msra.mxu0 0
    %484 = vmatprep.subr.bf16.mxu0 0
    %485 = vmatpush2.bf16.msra.mxu0 0
    %486 = vmatprep.subr.bf16.mxu0 0
    %487 = vmatpush2.bf16.msra.mxu0 0
    %488 = vmatprep.mubr.bf16.mxu0 0
    %489 = vmatmul.mubr.bf16.gmra.mxu0 %v391
    %v490 = vpop.f32.mrf.mxu0
    %v491 = vadd.f32 0.0, %v490
    %v492 = vpop.f32.mrf.mxu0
    %v493 = vpop.f32.mrf.mxu0
    %v494 = vpop.f32.mrf.mxu0
    %495 = vdwg.mxu0
    %vm496 = vcmask 130048
    %v497 = vsel %vm496, %v491, 0.0
    %v498 = vrot.slane %v497, 4
    %v499 = vadd.f32 %v497, %v498
    %v500 = vrot.slane %v499, 2
    %v501 = vadd.f32 %v499, %v500
    %v502 = vrot.slane %v501, 1
    %v503 = vadd.f32 %v501, %v502
    %v504 = vmul.f32 %v503, %v121
    %v505 = vmul.f32 %v491, %v491
    %v506 = vsel %vm496, %v505, 0.0
    %v507 = vrot.slane %v506, 4
    %v508 = vadd.f32 %v506, %v507
    %v509 = vrot.slane %v508, 2
    %v510 = vadd.f32 %v508, %v509
    %v511 = vrot.slane %v510, 1
    %v512 = vadd.f32 %v510, %v511
    %v513 = vmul.f32 %v512, %v121
    %v514 = vmul.f32 %v504, %v504
    %v515 = vsub.f32 %v513, %v514
    %v516 = vmax.f32 %v515, 0.0
    %v517 = vadd.f32 %v516, 1e-05
    %v518 = vrsqrt.pop %v517
    %v519 = vmul.f32 %v36, %v518
    %v520 = vmul.f32 %v504, %v519
    %v522 = vrot.slane %v520, 7
    %v524 = vsub.f32 %v36, %v522
    %v525 = vlaneseq
    %v526 = vshrl.u32 %v525, 7
    %v527 = vsub.s32 4, %v526
    %v528 = vrot.slane %v519, %v527
    %v529 = vmul.f32 %v491, %v528
    %v530 = vlaneseq
    %v531 = vshrl.u32 %v530, 7
    %v532 = vsub.s32 5, %v531
    %v533 = vrot.slane %v524, %v532
    %v534 = vadd.f32 %v529, %v533
    %v535 = vsel %vm496, %v534, -inf
    %536 = vmax.xlane.f32.xlu0 %v535
    %v537 = vpop.xlane.xlu0 %536
    %v538 = vsub.f32 %v534, %v537
    %v539 = vmul.f32 %v538, 1.442695
    %v540 = vpow.pop %v539
    %v541 = vsel %vm496, %v540, 0.0
    %542 = vadd.xlane.f32.xlu0 %v541
    %v543 = vpop.xlane.xlu0 %542
    %v544 = vrcp.pop %v543
    %v545 = vmul.f32 %v540, %v544
    %546 = vst.msk [vmem:[#allocation5] sm:$0xff] %vm496, %v545
    // Predicated region
    $region26: #{encoder_forward.1} parent=1 // pred_check
      _
    $region27: #{encoder_forward.1} parent=1 // pred_check_branch
      %548 = sbr.rel (0) target = $region29
    $region28: #{encoder_forward.1} parent=1 // pred_region
      %s550 = ssub.s32 128, 128
      %551 = vsyncadd [#allocation4], %s550
      %s553 = sshll.u32 [#allocation5], 4
      %s554 = int_to_ptr.vmem [resolvable:$true] %s553
      %556 = dma.vmem_to_hbm [thread:$0]  %s554, 128, %s5, [#allocation4]
    $region29: #{encoder_forward.1} parent=1 // pred_fallthru
      _
    // Predicated region
    $region30: #{encoder_forward.1} parent=1 // pred_check
      _
    $region31: #{encoder_forward.1} parent=1 // pred_check_branch
      %558 = sbr.rel (0) target = $region33
    $region32: #{encoder_forward.1} parent=1 // pred_region
      %559 = dma.done [#allocation4], 128
    $region33: #{encoder_forward.1} parent=1 // pred_fallthru
      _
    %560 = vsyncpa [#allocation3], 1
    %561 = vsyncpa [#allocation4], 1

</llo_original>
